<compile_context>
chip_gen: v7x
topology: tpu7x:2x2x1
jax: 0.10.0
libtpu: 0.0.40
codegen_flags: <defaults>
</compile_context>

<pallas_src>
import functools

import jax
import jax.numpy as jnp
from jax.experimental import pallas as pl
from jax.experimental.pallas import tpu as pltpu


def _pl_loss_kernel(logits_ref, side_ref, const_ref, loss_ref, sums_ref,
                    m_run, z_run, *, max_k, vocab, vc, k_eq_v):
    j = pl.program_id(1)
    nj = pl.num_programs(1)

    # --- online LSE accumulators, re-initialised at the start of each row tile
    @pl.when(j == 0)
    def _():
        m_run[...] = jnp.full_like(m_run, -jnp.inf)
        z_run[...] = jnp.zeros_like(z_run)

    # Native-dtype load; the f32 upcast is folded into the exp expression so no
    # named [tm, vc] f32 copy is materialised (max is exact in bf16).
    x = logits_ref[...]                                        # [tm, vc] native
    if vocab % vc:
        # ragged last vocab block: neutralise out-of-range lanes (static branch)
        col = j * vc + jax.lax.broadcasted_iota(jnp.int32, x.shape, 1)
        neg_cap = jnp.asarray(jnp.finfo(x.dtype).min, dtype=x.dtype)
        x = jnp.where(col < vocab, x, neg_cap)

    m_prev = m_run[...]                                        # [tm, 1] f32
    m_blk = jnp.max(x, axis=-1, keepdims=True).astype(jnp.float32)
    m_new = jnp.maximum(m_prev, m_blk)
    z_blk = jnp.sum(jnp.exp(x.astype(jnp.float32) - m_new),
                    axis=-1, keepdims=True)
    z_run[...] = z_run[...] * jnp.exp(m_prev - m_new) + z_blk
    m_run[...] = m_new

    # --- finalize on the last vocab step: rank loss, mask, partial sums ------
    @pl.when(j == nj - 1)
    def _():
        side = side_ref[...]                                   # [tm, K+1] f32
        lg = side[:, :max_k]                                   # gathered logits
        lens = side[:, max_k:max_k + 1]                        # lengths (f32)
        m = m_run[...]
        Z = z_run[...]

        eg = jnp.exp(lg - m)                                   # [tm, K]
        tri = const_ref[:max_k, :]                             # [K, K] upper-tri
        eta_row = const_ref[max_k:max_k + 1, :]                # [1, K] eta ramp
        # exclusive prefix sum over ranks as one tiny MXU matmul (MXU is idle)
        Z_mod = jnp.dot(eg, tri, preferred_element_type=jnp.float32)

        loss = jnp.log(Z - Z_mod + eta_row) + m - lg           # [tm, K]

        k_iota = jax.lax.broadcasted_iota(jnp.int32, (1, max_k), 1)
        if k_eq_v:   # static; mirrors the scatter_ of zeros at rank K-1
            loss = jnp.where(k_iota == max_k - 1, 0.0, loss)

        # length mask + masked_fill(0.0); also kills garbage rows of a ragged
        # last row tile (their padded lens are 0, select blocks NaN propagation)
        mask = (k_iota.astype(jnp.float32) < lens).astype(jnp.float32)
        loss = jnp.where(mask > 0.0, loss, 0.0)
        loss_ref[...] = loss

        # partial sums for .avg: sublane 0 = sum(loss), sublane 1+ = sum(mask)
        sub = jax.lax.broadcasted_iota(jnp.int32, (1, 8, 128), 1)
        sums_ref[...] = jnp.where(sub == 0, jnp.sum(loss), jnp.sum(mask))


def _vmem_plan():
    """(VMEM budget/limit in bytes, row-tile cap), derived per TPU generation."""
    cap = 128 * 1024 * 1024
    try:
        info = pltpu.get_tpu_info()
        cap = int(getattr(info, "vmem_capacity_bytes", cap))
    except Exception:
        pass
    budget = int(cap * 0.6)          # ~38 MiB on v7x (64 MiB), ~76 MiB on v5e/v6e
    tm_cap = 1024 if cap >= (100 << 20) else 512
    return budget, tm_cap


def _tile_plan(n_rows, vocab, itemsize, max_k, budget, tm_cap):
    """Pick (tm, vc): row tile and vocab tile fitting the VMEM budget."""
    rows8 = max(8, ((n_rows + 7) // 8) * 8)
    per_elem = 2 * itemsize + 8                     # dbl-buffered input + f32 temps
    per_row = 2 * (max_k + 1) * 4 + 2 * max_k * 4 + 16   # side + loss + scratch
    fixed = 2 * 8 * 128 * 4 + (max_k + 1) * max_k * 4 + (1 << 20)

    def max_tm(vc):
        t = (budget - fixed) // max(vc * per_elem + per_row, 1)
        return max(0, min(tm_cap, rows8, (t // 8) * 8))

    if max_tm(vocab) >= min(rows8, 256):
        vc = vocab                                  # single vocab step
    else:
        tm_target = min(tm_cap, rows8, 512)
        vc = (budget - fixed - tm_target * per_row) // max(tm_target * per_elem, 1)
        vc = min(vocab, max(128, (vc // 128) * 128))  # lane-multiple chunk
    tm = max(8, max_tm(vc))

    # keep >= 2 row tiles so the 'parallel' axis shards across both TCs on v7x;
    # near-free on single-TC chips (tile 512 vs 1024 ~ same HBM roofline).
    if n_rows >= 16 and tm >= n_rows:
        tm = max(8, (((n_rows + 1) // 2 + 7) // 8) * 8)
    return int(tm), int(vc)


def plackett_luce_loss(logits, pl_targets, target_lengths=None, reduce='none',
                       *, eta=1e-6, tiles=None):
    """Mirrors PlackettLuceLoss.forward: returns (avg_loss, loss, num).

    `loss` is returned flattened to [N, max_k] (or [N] for reduce='ranks'),
    exactly like the PyTorch module.
    """
    # TODO(synk): the `orders` gather branch and `target_values` weighting
    # branch of the PyTorch forward are not implemented here.
    V = logits.shape[-1]
    K = pl_targets.shape[-1]
    logits2 = jnp.reshape(logits, (-1, V))                       # native dtype
    tgts2 = jnp.reshape(pl_targets, (-1, K)).astype(jnp.int32)
    N = logits2.shape[0]
    itemsize = jnp.dtype(logits2.dtype).itemsize

    # Hoist the rank gather out of the kernel (tiny [N, K] pass in XLA).
    lg = jnp.take_along_axis(logits2, tgts2, axis=-1).astype(jnp.float32)

    if target_lengths is None:
        # all ranks valid: sum(loss)/sum(mask) reproduces the mean branch.
        lens = jnp.full((N,), K, jnp.int32)
    else:
        lens = jnp.reshape(target_lengths, (-1,)).astype(jnp.int32)

    # Fold lengths into the gathered-logits side input: [N, K+1] f32.
    side = jnp.concatenate([lg, lens[:, None].astype(jnp.float32)], axis=-1)

    budget, tm_cap = _vmem_plan()
    if tiles is None:
        tm, vc = _tile_plan(N, V, itemsize, K, budget, tm_cap)
    else:
        tm, vc = tiles
    ni = pl.cdiv(N, tm)
    nj = pl.cdiv(V, vc)
    Np = ni * tm
    if Np != N:
        # Only the tiny side input is padded (lens=0 pad rows mask the garbage
        # rows the ragged last logits tile over-reads).  The dominant [N, V]
        # logits tensor is NOT copied / padded.
        side = jnp.pad(side, ((0, Np - N), (0, 0)))

    # Grid-resident constants: strictly-upper-triangular prefix-sum matrix
    # stacked with the eta ramp -> one tiny [K+1, K] input, DMAed once.
    r = jnp.arange(K, dtype=jnp.int32)
    tri = (r[:, None] < r[None, :]).astype(jnp.float32)             # [K, K]
    eta_row = (r.astype(jnp.float32) * (eta / K))[None, :]          # [1, K]
    const = jnp.concatenate([tri, eta_row], axis=0)                 # [K+1, K]

    kernel = functools.partial(_pl_loss_kernel, max_k=K, vocab=V, vc=vc,
                               k_eq_v=(K == V))
    cost = pl.CostEstimate(
        flops=int(3 * N * V + 2 * N * K * K + 8 * N * K),
        transcendentals=int(N * V + 2 * N * K),
        bytes_accessed=int(N * V * itemsize + Np * (K + 1) * 4 + N * K * 4
                           + ni * 8 * 128 * 4 + (K + 1) * K * 4),
    )

    loss, sums = pl.pallas_call(
        kernel,
        out_shape=(
            jax.ShapeDtypeStruct((N, K), jnp.float32),
            jax.ShapeDtypeStruct((ni, 8, 128), jnp.float32),
        ),
        grid_spec=pltpu.PrefetchScalarGridSpec(
            num_scalar_prefetch=0,
            grid=(ni, nj),                     # rows parallel, vocab reduction last
            in_specs=[
                pl.BlockSpec((tm, vc), lambda i, j: (i, j)),
                pl.BlockSpec((tm, K + 1), lambda i, j: (i, 0)),
                pl.BlockSpec((K + 1, K), lambda i, j: (0, 0)),
            ],
            out_specs=[
                pl.BlockSpec((tm, K), lambda i, j: (i, 0)),
                pl.BlockSpec((1, 8, 128), lambda i, j: (i, 0, 0)),
            ],
            scratch_shapes=[
                pltpu.VMEM((tm, 1), jnp.float32),   # running max
                pltpu.VMEM((tm, 1), jnp.float32),   # running Z
            ],
        ),
        compiler_params=pltpu.CompilerParams(
            dimension_semantics=("parallel", "arbitrary"),
            vmem_limit_bytes=budget),
        cost_estimate=cost,
    )(logits2, side, const)

    sum_loss = jnp.sum(sums[:, 0, 0])
    num = jnp.sum(sums[:, 1, 0])
    avg_loss = sum_loss / num
    if reduce == 'ranks':
        loss = jnp.sum(loss, axis=-1)
    return avg_loss, loss, num


def _reference(logits, pl_targets, target_lengths, eta=1e-6):
    """Pure-JAX transcription of PlackettLuceLoss._forward + avg (reduce='none')."""
    V = logits.shape[-1]
    K = pl_targets.shape[-1]
    logits = jnp.reshape(logits, (-1, V)).astype(jnp.float32)
    tgt = jnp.reshape(pl_targets, (-1, K))
    m = jnp.max(logits, axis=-1, keepdims=True)
    exp_logits = jnp.exp(logits - m)
    lg = jnp.take_along_axis(logits, tgt, axis=-1)
    eg = jnp.exp(lg - m)
    eg_shift = jnp.concatenate(
        [jnp.zeros((logits.shape[0], 1), jnp.float32), eg[:, :-1]], axis=-1)
    Z = jnp.sum(exp_logits, axis=-1, keepdims=True)
    Z_mod = jnp.cumsum(eg_shift, axis=-1)
    eta_range = jnp.arange(K, dtype=jnp.float32) * (eta / K)
    Zl = jnp.log(Z - Z_mod + eta_range) + m
    loss = Zl - lg
    if K == V:
        loss = loss.at[:, -1].set(0.0)
    mask = (jnp.arange(K, dtype=jnp.int32)[None, :] <
            jnp.reshape(target_lengths, (-1, 1)).astype(jnp.int32)
            ).astype(jnp.float32)
    loss = jnp.where(mask > 0.0, loss, 0.0)
    num = jnp.sum(mask)
    return jnp.sum(loss) / num, loss, num


if __name__ == "__main__":
    key = jax.random.PRNGKey(0)
    k1, k2, k3 = jax.random.split(key, 3)

    d1, d2 = 2, 9          # N = 18 rows (exercises the ragged last row tile)
    V = 32                 # vocab_size
    K = 8                  # max_k

    logits = jax.random.normal(k1, (d1, d2, V), dtype=jnp.float32)
    pl_targets = jnp.argsort(
        jax.random.uniform(k2, (d1, d2, V)), axis=-1)[..., :K].astype(jnp.int32)
    target_lengths = jax.random.randint(k3, (d1, d2), 1, K + 1, dtype=jnp.int32)

    # --- f32 logits, explicit target_lengths, auto tiling ---
    avg_loss, loss, num = plackett_luce_loss(logits, pl_targets, target_lengths)
    jax.block_until_ready((avg_loss, loss, num))
    ref_avg, ref_loss, ref_num = _reference(logits, pl_targets, target_lengths)
    assert jnp.allclose(loss, ref_loss, atol=1e-4, rtol=1e-4)
    assert jnp.allclose(avg_loss, ref_avg, atol=1e-4, rtol=1e-4)
    assert jnp.allclose(num, ref_num)

    # --- target_lengths = None (mean branch) ---
    avg2, loss2, num2 = plackett_luce_loss(logits, pl_targets, None)
    jax.block_until_ready((avg2, loss2, num2))
    full_lens = jnp.full((d1, d2), K, jnp.int32)
    ref_avg2, ref_loss2, ref_num2 = _reference(logits, pl_targets, full_lens)
    assert jnp.allclose(loss2, ref_loss2, atol=1e-4, rtol=1e-4)
    assert jnp.allclose(avg2, ref_avg2, atol=1e-4, rtol=1e-4)
    assert jnp.allclose(num2, ref_num2)

    # --- bf16 logits in HBM (kernel upcasts in VMEM), reduce='ranks' ---
    logits_bf16 = logits.astype(jnp.bfloat16)
    avg3, loss3, num3 = plackett_luce_loss(
        logits_bf16, pl_targets, target_lengths, reduce='ranks')
    jax.block_until_ready((avg3, loss3, num3))
    ref_avg3, ref_loss3, ref_num3 = _reference(
        logits_bf16.astype(jnp.float32), pl_targets, target_lengths)
    assert jnp.allclose(loss3, jnp.sum(ref_loss3, axis=-1), atol=1e-3, rtol=1e-3)
    assert jnp.allclose(avg3, ref_avg3, atol=1e-3, rtol=1e-3)
    assert jnp.allclose(num3, ref_num3)

    # --- vocab-tiled online-LSE path (forced small tiles), V % vc == 0 ---
    V2 = 384
    logits_v2 = jax.random.normal(k1, (d1, d2, V2), dtype=jnp.float32)
    tgt_v2 = jnp.argsort(
        jax.random.uniform(k2, (d1, d2, V2)), axis=-1)[..., :K].astype(jnp.int32)
    avg4, loss4, num4 = plackett_luce_loss(
        logits_v2, tgt_v2, target_lengths, tiles=(16, 128))
    jax.block_until_ready((avg4, loss4, num4))
    ref_avg4, ref_loss4, ref_num4 = _reference(logits_v2, tgt_v2, target_lengths)
    assert jnp.allclose(loss4, ref_loss4, atol=1e-4, rtol=1e-4)
    assert jnp.allclose(avg4, ref_avg4, atol=1e-4, rtol=1e-4)
    assert jnp.allclose(num4, ref_num4)

    # --- vocab-tiled with a ragged last vocab block (V % vc != 0) ---
    V3 = 200
    logits_v3 = jax.random.normal(k1, (d1, d2, V3), dtype=jnp.float32)
    tgt_v3 = jnp.argsort(
        jax.random.uniform(k2, (d1, d2, V3)), axis=-1)[..., :K].astype(jnp.int32)
    avg5, loss5, num5 = plackett_luce_loss(
        logits_v3, tgt_v3, target_lengths, tiles=(16, 128))
    jax.block_until_ready((avg5, loss5, num5))
    ref_avg5, ref_loss5, ref_num5 = _reference(logits_v3, tgt_v3, target_lengths)
    assert jnp.allclose(loss5, ref_loss5, atol=1e-4, rtol=1e-4)
    assert jnp.allclose(avg5, ref_avg5, atol=1e-4, rtol=1e-4)
    assert jnp.allclose(num5, ref_num5)

    print("KERNEL_OK")
</pallas_src>

<mosaic_0001>
module attributes {stable_mosaic.version = 11 : i64} {
  func.func @_pl_loss_kernel(%arg0: i32, %arg1: i32, %arg2: memref<16x32xf32, #tpu.memory_space<vmem>>, %arg3: memref<16x9xf32, #tpu.memory_space<vmem>>, %arg4: memref<9x8xf32, #tpu.memory_space<vmem>>, %arg5: memref<16x8xf32, #tpu.memory_space<vmem>>, %arg6: memref<1x8x128xf32, #tpu.memory_space<vmem>>, %arg7: memref<16x1xf32, #tpu.memory_space<vmem>>, %arg8: memref<16x1xf32, #tpu.memory_space<vmem>>) attributes {dimension_semantics = [#tpu.dimension_semantics<parallel>, #tpu.dimension_semantics<arbitrary>], iteration_bounds = array<i64: 2, 1>, scalar_prefetch = 0 : i64, scratch_operands = 2 : i64, tpu.core_type = #tpu.core_type<tc>, window_params = [{transform_indices = @transform_0, window_bounds = array<i64: 16, 32>}, {transform_indices = @transform_1, window_bounds = array<i64: 16, 9>}, {pipeline_mode = #tpu.pipeline_mode<synchronous>, transform_indices = @transform_2, window_bounds = array<i64: 9, 8>}, {transform_indices = @transform_3, window_bounds = array<i64: 16, 8>}, {transform_indices = @transform_4, window_bounds = array<i64: 1, 8, 128>}]} {
    %c0_i32 = arith.constant 0 : i32
    %0 = arith.cmpi eq, %arg1, %c0_i32 : i32
    %1 = arith.extui %0 : i1 to i32
    %c0_i32_0 = arith.constant 0 : i32
    %2 = arith.cmpi ne, %1, %c0_i32_0 : i32
    scf.if %2 {
      %cst_13 = arith.constant 0xFF800000 : f32
      %23 = vector.broadcast %cst_13 : f32 to vector<16x1xf32>
      %c0_14 = arith.constant 0 : index
      %c0_15 = arith.constant 0 : index
      %24 = vector.load %arg7[%c0_14, %c0_15] : memref<16x1xf32, #tpu.memory_space<vmem>>, vector<16x1xf32>
      tpu.vector_store %arg7[%c0_14, %c0_15], %23 {strides = array<i32>} : memref<16x1xf32, #tpu.memory_space<vmem>>, vector<16x1xf32>,
      %cst_16 = arith.constant 0.000000e+00 : f32
      %25 = vector.broadcast %cst_16 : f32 to vector<16x1xf32>
      %c0_17 = arith.constant 0 : index
      %c0_18 = arith.constant 0 : index
      %26 = vector.load %arg8[%c0_17, %c0_18] : memref<16x1xf32, #tpu.memory_space<vmem>>, vector<16x1xf32>
      tpu.vector_store %arg8[%c0_17, %c0_18], %25 {strides = array<i32>} : memref<16x1xf32, #tpu.memory_space<vmem>>, vector<16x1xf32>,
    } else {
    }
    %c0 = arith.constant 0 : index
    %c0_1 = arith.constant 0 : index
    %3 = vector.load %arg2[%c0, %c0_1] : memref<16x32xf32, #tpu.memory_space<vmem>>, vector<16x32xf32>
    %c0_2 = arith.constant 0 : index
    %c0_3 = arith.constant 0 : index
    %4 = vector.load %arg7[%c0_2, %c0_3] : memref<16x1xf32, #tpu.memory_space<vmem>>, vector<16x1xf32>
    %cst = arith.constant dense<0xFF800000> : vector<16xf32>
    %5 = vector.multi_reduction <maximumf>, %3, %cst [1] : vector<16x32xf32> to vector<16xf32>
    %6 = vector.shape_cast %5 : vector<16xf32> to vector<16x1xf32>
    %7 = arith.maximumf %4, %6 : vector<16x1xf32>
    %8 = vector.broadcast %7 : vector<16x1xf32> to vector<16x32xf32>
    %9 = arith.subf %3, %8 : vector<16x32xf32>
    %10 = math.exp %9 : vector<16x32xf32>
    %cst_4 = arith.constant dense<0.000000e+00> : vector<16xf32>
    %11 = vector.multi_reduction <add>, %10, %cst_4 [1] : vector<16x32xf32> to vector<16xf32>
    %12 = vector.shape_cast %11 : vector<16xf32> to vector<16x1xf32>
    %c0_5 = arith.constant 0 : index
    %c0_6 = arith.constant 0 : index
    %13 = vector.load %arg8[%c0_5, %c0_6] : memref<16x1xf32, #tpu.memory_space<vmem>>, vector<16x1xf32>
    %14 = arith.subf %4, %7 : vector<16x1xf32>
    %15 = math.exp %14 : vector<16x1xf32>
    %16 = arith.mulf %13, %15 : vector<16x1xf32>
    %17 = arith.addf %16, %12 : vector<16x1xf32>
    %c0_7 = arith.constant 0 : index
    %c0_8 = arith.constant 0 : index
    %18 = vector.load %arg8[%c0_7, %c0_8] : memref<16x1xf32, #tpu.memory_space<vmem>>, vector<16x1xf32>
    tpu.vector_store %arg8[%c0_7, %c0_8], %17 {strides = array<i32>} : memref<16x1xf32, #tpu.memory_space<vmem>>, vector<16x1xf32>,
    %c0_9 = arith.constant 0 : index
    %c0_10 = arith.constant 0 : index
    %19 = vector.load %arg7[%c0_9, %c0_10] : memref<16x1xf32, #tpu.memory_space<vmem>>, vector<16x1xf32>
    tpu.vector_store %arg7[%c0_9, %c0_10], %7 {strides = array<i32>} : memref<16x1xf32, #tpu.memory_space<vmem>>, vector<16x1xf32>,
    %c0_i32_11 = arith.constant 0 : i32
    %20 = arith.cmpi eq, %arg1, %c0_i32_11 : i32
    %21 = arith.extui %20 : i1 to i32
    %c0_i32_12 = arith.constant 0 : i32
    %22 = arith.cmpi ne, %21, %c0_i32_12 : i32
    scf.if %22 {
      %c0_13 = arith.constant 0 : index
      %c0_14 = arith.constant 0 : index
      %23 = vector.load %arg3[%c0_13, %c0_14] : memref<16x9xf32, #tpu.memory_space<vmem>>, vector<16x9xf32>
      %24 = vector.extract_strided_slice %23 {offsets = [0, 0], sizes = [16, 8], strides = [1, 1]} : vector<16x9xf32> to vector<16x8xf32>
      %25 = vector.extract_strided_slice %23 {offsets = [0, 8], sizes = [16, 1], strides = [1, 1]} : vector<16x9xf32> to vector<16x1xf32>
      %c0_15 = arith.constant 0 : index
      %c0_16 = arith.constant 0 : index
      %26 = vector.load %arg7[%c0_15, %c0_16] : memref<16x1xf32, #tpu.memory_space<vmem>>, vector<16x1xf32>
      %c0_17 = arith.constant 0 : index
      %c0_18 = arith.constant 0 : index
      %27 = vector.load %arg8[%c0_17, %c0_18] : memref<16x1xf32, #tpu.memory_space<vmem>>, vector<16x1xf32>
      %28 = vector.broadcast %26 : vector<16x1xf32> to vector<16x8xf32>
      %29 = arith.subf %24, %28 : vector<16x8xf32>
      %30 = math.exp %29 : vector<16x8xf32>
      %c0_19 = arith.constant 0 : index
      %c0_20 = arith.constant 0 : index
      %31 = vector.load %arg4[%c0_19, %c0_20] : memref<9x8xf32, #tpu.memory_space<vmem>>, vector<8x8xf32>
      %c8 = arith.constant 8 : index
      %c0_21 = arith.constant 0 : index
      %32 = vector.load %arg4[%c8, %c0_21] : memref<9x8xf32, #tpu.memory_space<vmem>>, vector<1x8xf32>
      %cst_22 = arith.constant dense<0.000000e+00> : vector<16x8xf32>
      %33 = tpu.matmul %30, %31, %cst_22 {dimension_numbers = #tpu.dot_dimension_numbers<[1], [0], [0], [1], [0, 0, 1, 1], [], []>} : vector<16x8xf32>, vector<8x8xf32>, vector<16x8xf32> -> vector<16x8xf32>
      %34 = vector.broadcast %27 : vector<16x1xf32> to vector<16x8xf32>
      %35 = arith.subf %34, %33 : vector<16x8xf32>
      %36 = vector.broadcast %32 : vector<1x8xf32> to vector<16x8xf32>
      %37 = arith.addf %35, %36 : vector<16x8xf32>
      %38 = math.log %37 : vector<16x8xf32>
      %39 = vector.broadcast %26 : vector<16x1xf32> to vector<16x8xf32>
      %40 = arith.addf %38, %39 : vector<16x8xf32>
      %41 = arith.subf %40, %24 : vector<16x8xf32>
      %42 = tpu.iota {dimensions = array<i32: 1>} : vector<1x8xi32>
      %43 = arith.sitofp %42 : vector<1x8xi32> to vector<1x8xf32>
      %44 = vector.broadcast %43 : vector<1x8xf32> to vector<16x8xf32>
      %45 = vector.broadcast %25 : vector<16x1xf32> to vector<16x8xf32>
      %46 = arith.cmpf olt, %44, %45 : vector<16x8xf32>
      %47 = arith.extui %46 : vector<16x8xi1> to vector<16x8xi32>
      %48 = arith.sitofp %47 : vector<16x8xi32> to vector<16x8xf32>
      %cst_23 = arith.constant 0.000000e+00 : f32
      %49 = vector.broadcast %cst_23 : f32 to vector<16x8xf32>
      %50 = arith.cmpf ogt, %48, %49 : vector<16x8xf32>
      %cst_24 = arith.constant 0.000000e+00 : f32
      %51 = vector.broadcast %cst_24 : f32 to vector<16x8xf32>
      %52 = arith.select %50, %41, %51 : vector<16x8xi1>, vector<16x8xf32>
      %c0_25 = arith.constant 0 : index
      %c0_26 = arith.constant 0 : index
      %53 = vector.load %arg5[%c0_25, %c0_26] : memref<16x8xf32, #tpu.memory_space<vmem>>, vector<16x8xf32>
      tpu.vector_store %arg5[%c0_25, %c0_26], %52 {strides = array<i32>} : memref<16x8xf32, #tpu.memory_space<vmem>>, vector<16x8xf32>,
      %54 = tpu.iota {dimensions = array<i32: 1>} : vector<1x8x128xi32>
      %c0_i32_27 = arith.constant 0 : i32
      %55 = vector.broadcast %c0_i32_27 : i32 to vector<1x8x128xi32>
      %56 = arith.cmpi eq, %54, %55 : vector<1x8x128xi32>
      %57 = vector.shape_cast %52 : vector<16x8xf32> to vector<1x16x8xf32>
      %cst_28 = arith.constant dense<0.000000e+00> : vector<1xf32>
      %58 = vector.multi_reduction <add>, %57, %cst_28 [1, 2] : vector<1x16x8xf32> to vector<1xf32>
      %59 = vector.shape_cast %58 : vector<1xf32> to vector<1x1x1xf32>
      %60 = vector.extract %59[0, 0, 0] : f32 from vector<1x1x1xf32>
      %61 = vector.shape_cast %48 : vector<16x8xf32> to vector<1x16x8xf32>
      %cst_29 = arith.constant dense<0.000000e+00> : vector<1xf32>
      %62 = vector.multi_reduction <add>, %61, %cst_29 [1, 2] : vector<1x16x8xf32> to vector<1xf32>
      %63 = vector.shape_cast %62 : vector<1xf32> to vector<1x1x1xf32>
      %64 = vector.extract %63[0, 0, 0] : f32 from vector<1x1x1xf32>
      %65 = vector.broadcast %60 : f32 to vector<1x8x128xf32>
      %66 = vector.broadcast %64 : f32 to vector<1x8x128xf32>
      %67 = arith.select %56, %65, %66 : vector<1x8x128xi1>, vector<1x8x128xf32>
      %c0_30 = arith.constant 0 : index
      %c0_31 = arith.constant 0 : index
      %c0_32 = arith.constant 0 : index
      %68 = vector.load %arg6[%c0_30, %c0_31, %c0_32] : memref<1x8x128xf32, #tpu.memory_space<vmem>>, vector<1x8x128xf32>
      tpu.vector_store %arg6[%c0_30, %c0_31, %c0_32], %67 {strides = array<i32>} : memref<1x8x128xf32, #tpu.memory_space<vmem>>, vector<1x8x128xf32>,
    } else {
    }
    return
  }
  func.func @transform_0(%arg0: i32, %arg1: i32) -> (i32, i32) {
    %c0_i32 = arith.constant 0 : i32
    return %arg0, %arg1 : i32, i32
  }
  func.func @transform_1(%arg0: i32, %arg1: i32) -> (i32, i32) {
    %c0_i32 = arith.constant 0 : i32
    %c0_i32_0 = arith.constant 0 : i32
    return %arg0, %c0_i32 : i32, i32
  }
  func.func @transform_2(%arg0: i32, %arg1: i32) -> (i32, i32) {
    %c0_i32 = arith.constant 0 : i32
    %c0_i32_0 = arith.constant 0 : i32
    %c0_i32_1 = arith.constant 0 : i32
    return %c0_i32, %c0_i32_0 : i32, i32
  }
  func.func @transform_3(%arg0: i32, %arg1: i32) -> (i32, i32) {
    %c0_i32 = arith.constant 0 : i32
    %c0_i32_0 = arith.constant 0 : i32
    return %arg0, %c0_i32 : i32, i32
  }
  func.func @transform_4(%arg0: i32, %arg1: i32) -> (i32, i32, i32) {
    %c0_i32 = arith.constant 0 : i32
    %c0_i32_0 = arith.constant 0 : i32
    %c0_i32_1 = arith.constant 0 : i32
    return %arg0, %c0_i32, %c0_i32_0 : i32, i32, i32
  }
}

</mosaic_0001>

<llo_original>
// kernel: tpu_custom_call.1
$region0: #{tpu_custom_call.1}
  #allocation0 [shape = 'u32[]', space=smem, size = 0x4, offset = 0x4, fixed_abs, tag = 'smem constant byte address 0x4 - core index']
  #allocation1 [shape = 'u32[144,128]{1,0:T(1,128)}', space=vmem, size = 0x12000, scoped, tag = 'internal scratch']
  #allocation2 [shape = 'f32[16,1]{1,0:T(8,128)}', space=vmem, size = 0x2000, scoped, tag = 'scratch operand']
  #allocation3 [shape = 'f32[16,1]{1,0:T(8,128)}', space=vmem, size = 0x2000, scoped, tag = 'scratch operand']
  %s0 = inlined_call_operand.hbm [shape: f32[18,32], index: 0, kind: input, shape index: {}]
  %s1 = inlined_call_operand.hbm [shape: f32[32,9], index: 1, kind: input, shape index: {}]
  %s2 = inlined_call_operand.hbm [shape: f32[9,8], index: 2, kind: input, shape index: {}]
  %s3 = inlined_call_operand.hbm [shape: f32[18,8], index: 3, kind: output, shape index: {0}]
  %s4 = inlined_call_operand.hbm [shape: f32[2,8,128], index: 4, kind: output, shape index: {1}]
  %5 = xla_tuple %s3, %s4
  %s6 = sld [smem:[#allocation0]]
  $region73: #{tpu_custom_call.1} parent=0
    _
  %s8 = ssub.s32 1, %s6
  %s9 = scalar_select 0, %s8, %s6
  $region1: #{tpu_custom_call.1} parent=0
    #allocation4 [shape = 'u8[16384]{0}', space=vmem, size = 0x4000, scoped, tag = 'input window, operand 0']
    #allocation5 [shape = 's32[2]{0}', space=sflag, size = 0x8, scoped, tag = 'scoped memory for tpu_custom_call.1']
    #allocation6 [shape = 's32[2]{0}', space=sflag, size = 0x8, scoped, tag = 'scoped memory for tpu_custom_call.1']
    #allocation7 [shape = 'u8[16384]{0}', space=vmem, size = 0x4000, scoped, tag = 'input window, operand 1']
    #allocation8 [shape = 's32[2]{0}', space=sflag, size = 0x8, scoped, tag = 'scoped memory for tpu_custom_call.1']
    #allocation9 [shape = 'u8[8192]{0}', space=vmem, size = 0x2000, scoped, tag = 'input window, operand 2, single buffered']
    #allocation10 [shape = 'u8[16384]{0}', space=vmem, size = 0x4000, scoped, tag = 'output window, operand 0']
    #allocation11 [shape = 'u8[8192]{0}', space=vmem, size = 0x2000, scoped, tag = 'output window, operand 1']
    #allocation12 [shape = 's32[2]{0}', space=sflag, size = 0x8, scoped, tag = 'scoped memory for tpu_custom_call.1']
    %10 = vsyncpa [#allocation5], 0
    %s11 = scalar_lea.sflag [#allocation5], 1
    %12 = vsyncpa %s11, 0
    %13 = vsyncpa [#allocation8], 0
    %s14 = scalar_lea.sflag [#allocation8], 1
    %15 = vsyncpa %s14, 0
    %16 = vsyncpa [#allocation6], 0
    %s17 = scalar_lea.sflag [#allocation6], 1
    %18 = vsyncpa %s17, 0
    %19 = vsyncpa [#allocation12], 0
    %s20 = scalar_lea.sflag [#allocation12], 1
    %21 = vsyncpa %s20, 0
    loop: start=0, step=1, limit=4
    $region2: #{tpu_custom_call.1} parent=1 // loop_pre_header
      _
    $region3: #{tpu_custom_call.1} parent=1 // loop_header
      %s23 = sphi 0, %s27
      %p24 = scmp.ge.s32.totalorder %s23, 4
      %s30 = sphi 0, %s42
      %s31 = sphi 0, %s38
      %s32 = sphi 0, %s30
      %s33 = sphi 0, %s31
      %s34 = sphi 0, %s32
      %s35 = sphi 0, %s33
      %s47 = sphi 0, %s49
      %s50 = sphi 0, %s47
      %s51 = sphi 0, %s50
      %s67 = sphi 0, %s51
      %s73 = sphi 0, %s75
      %s76 = sphi 0, %s73
      %s77 = sphi 0, %s76
      %s93 = sphi 0, %s77
      %s97 = sphi 0, %s97
      %s99 = sphi 0, %s97
      %s100 = sphi 0, %s99
      %s114 = sphi 0, %s100
      %s120 = sphi 0, %s122
      %s123 = sphi 0, %s120
      %s124 = sphi 0, %s123
      %s140 = sphi 0, %s124
      %s146 = sphi 0, %s148
      %s149 = sphi 0, %s146
      %s150 = sphi 0, %s149
      %s166 = sphi 0, %s150
    $region4: #{tpu_custom_call.1} parent=1 // loop_header_branch
      %26 = sbr.rel (%p24) target = $region8
    $region5: #{tpu_custom_call.1} parent=1 // loop_body
      %s28 = ssub.s32 %s23, 1
      %s29 = ssub.s32 %s23, 2
      %s36 = sadd.s32 1, %s31
      %p37 = scmp.ge.s32.totalorder %s36, 1
      %s38 = scalar_select %p37, 0, %s36
      %s39 = sadd.s32 1, %s30
      %s40 = scalar_select %p37, %s39, %s30
      %p41 = scmp.ge.s32.totalorder %s40, 2
      %s42 = scalar_select %p41, 0, %s40
      %s43 = ssub.s32 %s30, %s42
      %s44 = ssub.s32 %s31, %s38
      %s45 = sor.u32 %s43, %s44
      %p46 = scmp.eq.s32.totalorder %s45, 0
      %s48 = sadd.s32 %s47, 1
      %s49 = scalar_select %p46, %s47, %s48
      %p52 = pneg %p46
      %p53 = scmp.eq.s32.totalorder %s23, 1
      %p54 = por %p52, %p53
      %p55 = scmp.ne.s32.totalorder %s47, %s50
      %p56 = scmp.eq.s32.totalorder %s23, 0
      %p57 = por %p55, %p56
      %p58 = scmp.ne.s32.totalorder %s47, %s50
      %p59 = scmp.eq.s32.totalorder %s28, 1
      %p60 = por %p58, %p59
      %p61 = scmp.ne.s32.totalorder %s50, %s51
      %p62 = scmp.eq.s32.totalorder %s28, 0
      %p63 = por %p61, %p62
      %p64 = scmp.ne.s32.totalorder %s50, %s51
      %p65 = scmp.eq.s32.totalorder %s29, 1
      %p66 = por %p64, %p65
      %p68 = scmp.ne.s32.totalorder %s51, %s67
      %p69 = scmp.eq.s32.totalorder %s29, 0
      %p70 = por %p68, %p69
      %s71 = ssub.s32 %s30, %s42
      %p72 = scmp.eq.s32.totalorder %s71, 0
      %s74 = sadd.s32 %s73, 1
      %s75 = scalar_select %p72, %s73, %s74
      %p78 = pneg %p72
      %p79 = scmp.eq.s32.totalorder %s23, 1
      %p80 = por %p78, %p79
      %p81 = scmp.ne.s32.totalorder %s73, %s76
      %p82 = scmp.eq.s32.totalorder %s23, 0
      %p83 = por %p81, %p82
      %p84 = scmp.ne.s32.totalorder %s73, %s76
      %p85 = scmp.eq.s32.totalorder %s28, 1
      %p86 = por %p84, %p85
      %p87 = scmp.ne.s32.totalorder %s76, %s77
      %p88 = scmp.eq.s32.totalorder %s28, 0
      %p89 = por %p87, %p88
      %p90 = scmp.ne.s32.totalorder %s76, %s77
      %p91 = scmp.eq.s32.totalorder %s29, 1
      %p92 = por %p90, %p91
      %p94 = scmp.ne.s32.totalorder %s77, %s93
      %p95 = scmp.eq.s32.totalorder %s29, 0
      %p96 = por %p94, %p95
      %s98 = sadd.s32 %s97, 1
      %p101 = scmp.eq.s32.totalorder %s23, 1
      %p102 = scmp.ne.s32.totalorder %s97, %s99
      %p103 = scmp.eq.s32.totalorder %s23, 0
      %p104 = por %p102, %p103
      %p105 = scmp.ne.s32.totalorder %s97, %s99
      %p106 = scmp.eq.s32.totalorder %s28, 1
      %p107 = por %p105, %p106
      %p108 = scmp.ne.s32.totalorder %s99, %s100
      %p109 = scmp.eq.s32.totalorder %s28, 0
      %p110 = por %p108, %p109
      %p111 = scmp.ne.s32.totalorder %s99, %s100
      %p112 = scmp.eq.s32.totalorder %s29, 1
      %p113 = por %p111, %p112
      %p115 = scmp.ne.s32.totalorder %s100, %s114
      %p116 = scmp.eq.s32.totalorder %s29, 0
      %p117 = por %p115, %p116
      %s118 = ssub.s32 %s30, %s42
      %p119 = scmp.eq.s32.totalorder %s118, 0
      %s121 = sadd.s32 %s120, 1
      %s122 = scalar_select %p119, %s120, %s121
      %p125 = pneg %p119
      %p126 = scmp.eq.s32.totalorder %s23, 1
      %p127 = por %p125, %p126
      %p128 = scmp.ne.s32.totalorder %s120, %s123
      %p129 = scmp.eq.s32.totalorder %s23, 0
      %p130 = por %p128, %p129
      %p131 = scmp.ne.s32.totalorder %s120, %s123
      %p132 = scmp.eq.s32.totalorder %s28, 1
      %p133 = por %p131, %p132
      %p134 = scmp.ne.s32.totalorder %s123, %s124
      %p135 = scmp.eq.s32.totalorder %s28, 0
      %p136 = por %p134, %p135
      %p137 = scmp.ne.s32.totalorder %s123, %s124
      %p138 = scmp.eq.s32.totalorder %s29, 1
      %p139 = por %p137, %p138
      %p141 = scmp.ne.s32.totalorder %s124, %s140
      %p142 = scmp.eq.s32.totalorder %s29, 0
      %p143 = por %p141, %p142
      %s144 = ssub.s32 %s30, %s42
      %p145 = scmp.eq.s32.totalorder %s144, 0
      %s147 = sadd.s32 %s146, 1
      %s148 = scalar_select %p145, %s146, %s147
      %p151 = pneg %p145
      %p152 = scmp.eq.s32.totalorder %s23, 1
      %p153 = por %p151, %p152
      %p154 = scmp.ne.s32.totalorder %s146, %s149
      %p155 = scmp.eq.s32.totalorder %s23, 0
      %p156 = por %p154, %p155
      %p157 = scmp.ne.s32.totalorder %s146, %s149
      %p158 = scmp.eq.s32.totalorder %s28, 1
      %p159 = por %p157, %p158
      %p160 = scmp.ne.s32.totalorder %s149, %s150
      %p161 = scmp.eq.s32.totalorder %s28, 0
      %p162 = por %p160, %p161
      %p163 = scmp.ne.s32.totalorder %s149, %s150
      %p164 = scmp.eq.s32.totalorder %s29, 1
      %p165 = por %p163, %p164
      %p167 = scmp.ne.s32.totalorder %s150, %s166
      %p168 = scmp.eq.s32.totalorder %s29, 0
      %p169 = por %p167, %p168
      %p170 = scmp.le.s32.totalorder 1, %s23
      %p171 = scmp.lt.s32.totalorder %s23, 3
      %p172 = pnand %p170, %p171
      %p173 = pneg %p172
      // Predicated region
      $region9: #{tpu_custom_call.1} parent=5 // pred_check
        _
      $region10: #{tpu_custom_call.1} parent=5 // pred_check_branch
        %175 = sbr.rel (%p172) target = $region12
      $region11: #{tpu_custom_call.1} parent=5 // pred_region
        %s176 = ssub.s32 %s23, 1
        // Predicated region
        $region13: #{tpu_custom_call.1} parent=11 // pred_check
          %p177 = pneg %p110
        $region14: #{tpu_custom_call.1} parent=11 // pred_check_branch
          %179 = sbr.rel (%p177) target = $region16
        $region15: #{tpu_custom_call.1} parent=11 // pred_region
          %s181 = ssub.s32 256, 256
          %182 = vsyncadd [#allocation8], %s181
          %s183 = sshll.u32 [#allocation9], 4
          %s184 = int_to_ptr.vmem [resolvable:$true] %s183
          %189 = dma.hbm_to_vmem [thread:$0]  %s2, 256, %s184, [#allocation8], 128, 128, 8
        $region16: #{tpu_custom_call.1} parent=11 // pred_fallthru
          _
      $region12: #{tpu_custom_call.1} parent=5 // pred_fallthru
        _
      %p190 = scmp.lt.s32.totalorder %s23, 2
      // Predicated region
      $region17: #{tpu_custom_call.1} parent=5 // pred_check
        %p191 = pneg %p190
      $region18: #{tpu_custom_call.1} parent=5 // pred_check_branch
        %193 = sbr.rel (%p191) target = $region20
      $region19: #{tpu_custom_call.1} parent=5 // pred_region
        // Predicated region
        $region21: #{tpu_custom_call.1} parent=19 // pred_check
          %p194 = pneg %p57
        $region22: #{tpu_custom_call.1} parent=19 // pred_check_branch
          %196 = sbr.rel (%p194) target = $region24
        $region23: #{tpu_custom_call.1} parent=19 // pred_region
          %s197 = sand.u32 %s47, 1
          %s198 = scalar_lea.sflag [#allocation5], %s197
          %s199 = sand.u32 %s47, 1
          %s200 = smul.addr %s199, 16
          %s201 = scalar_lea.vmem [#allocation4], %s200
          %s202 = smul.u32 2, %s30
          %s203 = ssub.s32 3, %s202
          %p204 = scmp.lt.s32.totalorder %s203, 2
          %s205 = scalar_select %p204, %s203, 2
          %s206 = smul.u32 128, %s205
          %s208 = ssub.s32 256, %s206
          %209 = vsyncadd %s198, %s208
          %p210 = scmp.ne.s32.totalorder 0, %s206
          %s211 = sadd.s32 %s31, %s202
          %s212 = smul.addr %s211, 128
          %s213 = scalar_lea.hbm %s0, %s212
          %s214 = smul.u32 8, %s205
          %s215 = sshll.u32 %s201, 4
          %s216 = int_to_ptr.vmem [resolvable:$true] %s215
          %s217 = sshll.u32 %s214, 4
          %221 = dma.hbm_to_vmem [thread:$0]  (%p210), %s213, %s217, %s216, %s198, 128, 128, 8
        $region24: #{tpu_custom_call.1} parent=19 // pred_fallthru
          _
        // Predicated region
        $region25: #{tpu_custom_call.1} parent=19 // pred_check
          %p222 = pneg %p83
        $region26: #{tpu_custom_call.1} parent=19 // pred_check_branch
          %224 = sbr.rel (%p222) target = $region28
        $region27: #{tpu_custom_call.1} parent=19 // pred_region
          %s225 = sand.u32 %s23, 1
          %s226 = scalar_lea.sflag [#allocation8], %s225
          %s227 = sand.u32 %s73, 1
          %s228 = smul.addr %s227, 16
          %s229 = scalar_lea.vmem [#allocation7], %s228
          %s230 = smul.u32 2, %s30
          %s232 = ssub.s32 256, 256
          %233 = vsyncadd %s226, %s232
          %s234 = smul.addr %s230, 128
          %s235 = scalar_lea.hbm %s1, %s234
          %s236 = sshll.u32 %s229, 4
          %s237 = int_to_ptr.vmem [resolvable:$true] %s236
          %242 = dma.hbm_to_vmem [thread:$0]  %s235, 256, %s237, %s226, 128, 128, 8
        $region28: #{tpu_custom_call.1} parent=19 // pred_fallthru
          _
      $region20: #{tpu_custom_call.1} parent=5 // pred_fallthru
        _
      %p243 = scmp.le.s32.totalorder 1, %s23
      %p244 = scmp.lt.s32.totalorder %s23, 3
      %p245 = pnand %p243, %p244
      %p246 = pneg %p245
      // Predicated region
      $region29: #{tpu_custom_call.1} parent=5 // pred_check
        _
      $region30: #{tpu_custom_call.1} parent=5 // pred_check_branch
        %248 = sbr.rel (%p245) target = $region32
      $region31: #{tpu_custom_call.1} parent=5 // pred_region
        %s249 = ssub.s32 %s23, 1
        %s250 = sand.u32 %s50, 1
        %s251 = scalar_lea.sflag [#allocation5], %s250
        %s252 = sand.u32 %s50, 1
        %s253 = smul.addr %s252, 16
        %s254 = scalar_lea.vmem [#allocation4], %s253
        // Predicated region
        $region33: #{tpu_custom_call.1} parent=31 // pred_check
          %p255 = pneg %p63
        $region34: #{tpu_custom_call.1} parent=31 // pred_check_branch
          %257 = sbr.rel (%p255) target = $region36
        $region35: #{tpu_custom_call.1} parent=31 // pred_region
          %258 = dma.done %s251, 256
        $region36: #{tpu_custom_call.1} parent=31 // pred_fallthru
          _
        %s259 = sand.u32 %s28, 1
        %s260 = scalar_lea.sflag [#allocation8], %s259
        %s261 = sand.u32 %s76, 1
        %s262 = smul.addr %s261, 16
        %s263 = scalar_lea.vmem [#allocation7], %s262
        // Predicated region
        $region37: #{tpu_custom_call.1} parent=31 // pred_check
          %p264 = pneg %p89
        $region38: #{tpu_custom_call.1} parent=31 // pred_check_branch
          %266 = sbr.rel (%p264) target = $region40
        $region39: #{tpu_custom_call.1} parent=31 // pred_region
          %267 = dma.done %s260, 256
        $region40: #{tpu_custom_call.1} parent=31 // pred_fallthru
          _
        // Predicated region
        $region41: #{tpu_custom_call.1} parent=31 // pred_check
          %p268 = pneg %p110
        $region42: #{tpu_custom_call.1} parent=31 // pred_check_branch
          %270 = sbr.rel (%p268) target = $region44
        $region43: #{tpu_custom_call.1} parent=31 // pred_region
          %271 = dma.done [#allocation8], 256
        $region44: #{tpu_custom_call.1} parent=31 // pred_fallthru
          _
        %s272 = sand.u32 %s50, 1
        %s273 = scalar_lea.sflag [#allocation5], %s272
        %s274 = sand.u32 %s50, 1
        %s275 = smul.addr %s274, 16
        %s276 = scalar_lea.vmem [#allocation4], %s275
        %p277 = pneg %p63
        %p278 = pneg %p60
        %s279 = sand.u32 %s28, 1
        %s280 = scalar_lea.sflag [#allocation8], %s279
        %s281 = sand.u32 %s76, 1
        %s282 = smul.addr %s281, 16
        %s283 = scalar_lea.vmem [#allocation7], %s282
        %p284 = pneg %p89
        %p285 = pneg %p86
        %p286 = pneg %p110
        %p287 = pneg %p107
        %p288 = pneg %p136
        %p289 = pneg %p133
        %s290 = sand.u32 %s123, 1
        %s291 = scalar_lea.sflag [#allocation6], %s290
        %s292 = sand.u32 %s123, 1
        %s293 = smul.addr %s292, 16
        %s294 = scalar_lea.vmem [#allocation10], %s293
        %p295 = pneg %p162
        %p296 = pneg %p159
        %s297 = sand.u32 %s149, 1
        %s298 = scalar_lea.sflag [#allocation12], %s297
        %s299 = sand.u32 %s149, 1
        %s300 = smul.addr %s299, 8
        %s301 = scalar_lea.vmem [#allocation11], %s300
        %s302 = smul.u32 2, %s32
        %s303 = ssub.s32 3, %s302
        %p304 = scmp.lt.s32.totalorder %s303, 2
        %s305 = scalar_select %p304, %s303, 2
        %s306 = smul.u32 128, %s305
        %s307 = smul.u32 2, %s32
        %s308 = smul.u32 2, %s32
        %s309 = ssub.s32 3, %s308
        %p310 = scmp.lt.s32.totalorder %s309, 2
        %s311 = scalar_select %p310, %s309, 2
        %s312 = smul.u32 128, %s311
        %p313 = scmp.eq.s32.totalorder %s33, 0
        // Predicated region
        $region45: #{tpu_custom_call.1} parent=31 // pred_check
          %p314 = pneg %p313
        $region46: #{tpu_custom_call.1} parent=31 // pred_check_branch
          %316 = sbr.rel (%p314) target = $region48
        $region47: #{tpu_custom_call.1} parent=31 // pred_region
          %vm317 = vcmask 7168
          %318 = vst.msk [vmem:[#allocation2] sm:$0xff] %vm317, -inf
          %319 = vst.msk [vmem:[#allocation2 + $0x8] sm:$0xff] %vm317, -inf
          %320 = vst.msk [vmem:[#allocation3] sm:$0xff] %vm317, 0.0
          %321 = vst.msk [vmem:[#allocation3 + $0x8] sm:$0xff] %vm317, 0.0
        $region48: #{tpu_custom_call.1} parent=31 // pred_fallthru
          _
        %v322 = vld [vmem:[%s254] sm:$0xff]
        %v323 = vld [vmem:[%s254 + $0x8] sm:$0xff]
        %v324 = vld [vmem:[#allocation2] sm:$0xff]
        %v325 = vld [vmem:[#allocation2 + $0x8] sm:$0xff]
        %vm326 = vcmask 261120
        %v327 = vsel %vm326, %v322, -inf
        %328 = vmax.xlane.f32.xlu0 %v327
        %v329 = vpop.xlane.xlu0 %328
        %v330 = vsel %vm326, %v323, -inf
        %331 = vmax.xlane.f32.xlu0 %v330
        %v332 = vpop.xlane.xlu0 %331
        %v333 = vmax.f32 %v324, %v329
        %v334 = vmax.f32 %v325, %v332
        %336 = vset.pattern.permute.xlu0 0
        %337 = vperm.xlu0 %336, %v333
        %v338 = vpop.permute.xlu0 %337
        %341 = vset.pattern.permute.xlu0 0
        %342 = vperm.xlu0 %341, %v334
        %v343 = vpop.permute.xlu0 %342
        %v345 = vsub.f32 %v322, %v338
        %v346 = vsub.f32 %v323, %v343
        %v347 = vmul.f32 %v345, 1.442695
        %v348 = vpow.pop %v347
        %v349 = vmul.f32 %v346, 1.442695
        %v350 = vpow.pop %v349
        %v351 = vsel %vm326, %v348, 0.0
        %352 = vadd.xlane.f32.xlu0 %v351
        %v353 = vpop.xlane.xlu0 %352
        %v354 = vsel %vm326, %v350, 0.0
        %355 = vadd.xlane.f32.xlu0 %v354
        %v356 = vpop.xlane.xlu0 %355
        %v357 = vld [vmem:[#allocation3] sm:$0xff]
        %v358 = vld [vmem:[#allocation3 + $0x8] sm:$0xff]
        %v359 = vsub.f32 %v324, %v333
        %v360 = vsub.f32 %v325, %v334
        %v361 = vmul.f32 %v359, 1.442695
        %v362 = vpow.pop %v361
        %v363 = vmul.f32 %v360, 1.442695
        %v364 = vpow.pop %v363
        %v365 = vmul.f32 %v357, %v362
        %v366 = vmul.f32 %v358, %v364
        %v367 = vadd.f32 %v365, %v353
        %v368 = vadd.f32 %v366, %v356
        %vm369 = vcmask 7168
        %370 = vst.msk [vmem:[#allocation3] sm:$0xff] %vm369, %v367
        %371 = vst.msk [vmem:[#allocation3 + $0x8] sm:$0xff] %vm369, %v368
        %372 = vst.msk [vmem:[#allocation2] sm:$0xff] %vm369, %v333
        %373 = vst.msk [vmem:[#allocation2 + $0x8] sm:$0xff] %vm369, %v334
        // Predicated region
        $region49: #{tpu_custom_call.1} parent=31 // pred_check
          %p374 = pneg %p313
        $region50: #{tpu_custom_call.1} parent=31 // pred_check_branch
          %376 = sbr.rel (%p374) target = $region52
        $region51: #{tpu_custom_call.1} parent=31 // pred_region
          %v377 = vld [vmem:[%s263] sm:$0xff]
          %v378 = vld [vmem:[%s263 + $0x8] sm:$0xff]
          %v379 = vld [vmem:[#allocation2] sm:$0xff]
          %v380 = vld [vmem:[#allocation2 + $0x8] sm:$0xff]
          %v381 = vld [vmem:[#allocation3] sm:$0xff]
          %v382 = vld [vmem:[#allocation3 + $0x8] sm:$0xff]
          %384 = vset.pattern.permute.xlu0 0
          %385 = vperm.xlu0 %384, %v379
          %v386 = vpop.permute.xlu0 %385
          %389 = vset.pattern.permute.xlu0 0
          %390 = vperm.xlu0 %389, %v380
          %v391 = vpop.permute.xlu0 %390
          %v393 = vsub.f32 %v377, %v386
          %v394 = vsub.f32 %v378, %v391
          %v395 = vmul.f32 %v393, 1.442695
          %v396 = vpow.pop %v395
          %v397 = vmul.f32 %v394, 1.442695
          %v398 = vpow.pop %v397
          %v399 = vld [vmem:[#allocation9] sm:$0xff]
          %v400 = vld [vmem:[#allocation9 + $0x8] sm:$0x1]
          %vm401 = vcmask 64512
          %v403 = vsel %vm401, %v396, 0
          %v406 = vsel %vm401, %v398, 0
          %408 = vmatprep.subr.mxu0 0.0
          %409 = vmatpush1.msra.mxu0 %v399
          %410 = vmatprep.subr.mxu0 0.0
          %411 = vmatpush1.msra.mxu0 0.0
          %412 = vmatprep.subr.mxu0 0.0
          %413 = vmatpush1.msra.mxu0 0.0
          %414 = vmatprep.subr.mxu0 0.0
          %415 = vmatpush1.msra.mxu0 0.0
          %416 = vmatprep.subr.mxu0 0.0
          %417 = vmatpush1.msra.mxu0 0.0
          %418 = vmatprep.subr.mxu0 0.0
          %419 = vmatpush1.msra.mxu0 0.0
          %420 = vmatprep.subr.mxu0 0.0
          %421 = vmatpush1.msra.mxu0 0.0
          %422 = vmatprep.subr.mxu0 0.0
          %423 = vmatpush1.msra.mxu0 0.0
          %424 = vmatprep.subr.mxu0 0.0
          %425 = vmatpush1.msra.mxu0 0.0
          %426 = vmatprep.subr.mxu0 0.0
          %427 = vmatpush1.msra.mxu0 0.0
          %428 = vmatprep.subr.mxu0 0.0
          %429 = vmatpush1.msra.mxu0 0.0
          %430 = vmatprep.subr.mxu0 0.0
          %431 = vmatpush1.msra.mxu0 0.0
          %432 = vmatprep.subr.mxu0 0.0
          %433 = vmatpush1.msra.mxu0 0.0
          %434 = vmatprep.subr.mxu0 0.0
          %435 = vmatpush1.msra.mxu0 0.0
          %436 = vmatprep.subr.mxu0 0.0
          %437 = vmatpush1.msra.mxu0 0.0
          %438 = vmatprep.subr.mxu0 0.0
          %439 = vmatpush1.msra.mxu0 0.0
          %440 = vmatprep.subr.mxu0 0.0
          %441 = vmatpush1.msra.mxu0 0.0
          %442 = vmatprep.subr.mxu0 0.0
          %443 = vmatpush1.msra.mxu0 0.0
          %444 = vmatprep.subr.mxu0 0.0
          %445 = vmatpush1.msra.mxu0 0.0
          %446 = vmatprep.subr.mxu0 0.0
          %447 = vmatpush1.msra.mxu0 0.0
          %448 = vmatprep.subr.mxu0 0.0
          %449 = vmatpush1.msra.mxu0 0.0
          %450 = vmatprep.subr.mxu0 0.0
          %451 = vmatpush1.msra.mxu0 0.0
          %452 = vmatprep.subr.mxu0 0.0
          %453 = vmatpush1.msra.mxu0 0.0
          %454 = vmatprep.subr.mxu0 0.0
          %455 = vmatpush1.msra.mxu0 0.0
          %456 = vmatprep.subr.mxu0 0.0
          %457 = vmatpush1.msra.mxu0 0.0
          %458 = vmatprep.subr.mxu0 0.0
          %459 = vmatpush1.msra.mxu0 0.0
          %460 = vmatprep.subr.mxu0 0.0
          %461 = vmatpush1.msra.mxu0 0.0
          %462 = vmatprep.subr.mxu0 0.0
          %463 = vmatpush1.msra.mxu0 0.0
          %464 = vmatprep.subr.mxu0 0.0
          %465 = vmatpush1.msra.mxu0 0.0
          %466 = vmatprep.subr.mxu0 0.0
          %467 = vmatpush1.msra.mxu0 0.0
          %468 = vmatprep.subr.mxu0 0.0
          %469 = vmatpush1.msra.mxu0 0.0
          %470 = vmatprep.subr.mxu0 0.0
          %471 = vmatpush1.msra.mxu0 0.0
          %472 = vmatprep.mubr.f32.mxu0 0.0
          %473 = vmatmul.mubr.f32.gmra.mrb[0].mxu0 %v403
          %v474 = vpop.f32.mrb[0].mxu0
          %v475 = vadd.f32 0.0, %v474
          %v476 = vpop.f32.mrb[0].mxu0
          %477 = vmatprep.mubr.f32.mxu0 0.0
          %478 = vmatmul.mubr.f32.gmra.mrb[0].mxu0 %v406
          %v479 = vpop.f32.mrb[0].mxu0
          %v480 = vadd.f32 0.0, %v479
          %v481 = vpop.f32.mrb[0].mxu0
          %482 = vdwg.mxu0
          %484 = vset.pattern.permute.xlu0 0
          %485 = vperm.xlu0 %484, %v381
          %v486 = vpop.permute.xlu0 %485
          %489 = vset.pattern.permute.xlu0 0
          %490 = vperm.xlu0 %489, %v382
          %v491 = vpop.permute.xlu0 %490
          %v493 = vsub.f32 %v486, %v475
          %v494 = vsub.f32 %v491, %v480
          %v495 = vlaneseq
          %v496 = vshrl.u32 %v495, 7
          %v497 = vsub.s32 0, %v496
          %v498 = vrot.slane %v400, %v497
          %v499 = vadd.f32 %v493, %v498
          %v500 = vadd.f32 %v494, %v498
          %v501 = vlog2.pop %v499
          %v502 = vmul.f32 %v501, 0.6931472
          %v503 = vlog2.pop %v500
          %v504 = vmul.f32 %v503, 0.6931472
          %v505 = vadd.f32 %v502, %v386
          %v506 = vadd.f32 %v504, %v391
          %v507 = vsub.f32 %v505, %v377
          %v508 = vsub.f32 %v506, %v378
          %v509 = vlaneseq
          %v510 = vand.u32 %v509, 127
          %v511 = vcvt.s32.f32 %v510
          %513 = vset.pattern.permute.xlu0 8
          %514 = vperm.xlu0 %513, %v377
          %v515 = vpop.permute.xlu0 %514
          %518 = vset.pattern.permute.xlu0 8
          %519 = vperm.xlu0 %518, %v378
          %v520 = vpop.permute.xlu0 %519
          %vm522 = vcmp.lt.f32.partialorder %v511, %v515
          %vm523 = vcmp.lt.f32.partialorder %v511, %v520
          %v524 = vsel %vm522, 1, 0
          %v525 = vsel %vm523, 1, 0
          %v526 = vcvt.s32.f32 %v524
          %v527 = vcvt.s32.f32 %v525
          %vm528 = vcmp.gt.f32.partialorder %v526, 0.0
          %vm529 = vcmp.gt.f32.partialorder %v527, 0.0
          %v530 = vsel %vm528, %v507, 0.0
          %v531 = vsel %vm529, %v508, 0.0
          %532 = vst.msk [vmem:[%s294] sm:$0xff] %vm401, %v530
          %533 = vst.msk [vmem:[%s294 + $0x8] sm:$0xff] %vm401, %v531
          %v534 = vlaneseq
          %v535 = vshrl.u32 %v534, 7
          %vm536 = vcmp.eq.s32.totalorder %v535, 0
          %v537 = vsel %vm401, %v530, 0.0
          %v538 = vsel %vm401, %v531, 0.0
          %v539 = vadd.f32 %v537, %v538
          %540 = vadd.xlane.f32.xlu0 %v539
          %v541 = vpop.xlane.xlu0 %540
          %v542 = vrot.slane %v541, 4
          %v543 = vadd.f32 %v541, %v542
          %v544 = vrot.slane %v543, 2
          %v545 = vadd.f32 %v543, %v544
          %v546 = vrot.slane %v545, 1
          %v547 = vadd.f32 %v545, %v546
          %s548 = vtos %v547
          %v549 = vsel %vm401, %v526, 0.0
          %v550 = vsel %vm401, %v527, 0.0
          %v551 = vadd.f32 %v549, %v550
          %552 = vadd.xlane.f32.xlu0 %v551
          %v553 = vpop.xlane.xlu0 %552
          %v554 = vrot.slane %v553, 4
          %v555 = vadd.f32 %v553, %v554
          %v556 = vrot.slane %v555, 2
          %v557 = vadd.f32 %v555, %v556
          %v558 = vrot.slane %v557, 1
          %v559 = vadd.f32 %v557, %v558
          %s560 = vtos %v559
          %v561 = vstv %s548
          %v562 = vstv %s560
          %v563 = vsel %vm536, %v561, %v562
          %564 = vst [vmem:[%s301] sm:$0xff] %v563
        $region52: #{tpu_custom_call.1} parent=31 // pred_fallthru
          _
        %s565 = sand.u32 %s123, 1
        %s566 = scalar_lea.sflag [#allocation6], %s565
        %s567 = sand.u32 %s123, 1
        %s568 = smul.addr %s567, 16
        %s569 = scalar_lea.vmem [#allocation10], %s568
        %s570 = sand.u32 %s149, 1
        %s571 = scalar_lea.sflag [#allocation12], %s570
        %s572 = sand.u32 %s149, 1
        %s573 = smul.addr %s572, 8
        %s574 = scalar_lea.vmem [#allocation11], %s573
        // Predicated region
        $region53: #{tpu_custom_call.1} parent=31 // pred_check
          %p575 = pneg %p133
        $region54: #{tpu_custom_call.1} parent=31 // pred_check_branch
          %577 = sbr.rel (%p575) target = $region56
        $region55: #{tpu_custom_call.1} parent=31 // pred_region
          %s578 = smul.u32 2, %s32
          %s579 = ssub.s32 3, %s578
          %p580 = scmp.lt.s32.totalorder %s579, 2
          %s581 = scalar_select %p580, %s579, 2
          %s582 = smul.u32 128, %s581
          %s584 = ssub.s32 256, %s582
          %585 = vsyncadd %s566, %s584
          %p586 = scmp.ne.s32.totalorder 0, %s582
          %s587 = smul.addr %s578, 128
          %s588 = scalar_lea.hbm %s3, %s587
          %s589 = smul.u32 8, %s581
          %s590 = sshll.u32 %s569, 4
          %s591 = int_to_ptr.vmem [resolvable:$true] %s590
          %s592 = sshll.u32 %s589, 4
          %596 = dma.vmem_to_hbm [thread:$0]  (%p586), %s591, %s592, %s588, %s566, 128, 128, 8
        $region56: #{tpu_custom_call.1} parent=31 // pred_fallthru
          _
        // Predicated region
        $region57: #{tpu_custom_call.1} parent=31 // pred_check
          %p597 = pneg %p159
        $region58: #{tpu_custom_call.1} parent=31 // pred_check_branch
          %599 = sbr.rel (%p597) target = $region60
        $region59: #{tpu_custom_call.1} parent=31 // pred_region
          %s601 = ssub.s32 128, 128
          %602 = vsyncadd %s571, %s601
          %s603 = smul.addr %s32, 128
          %s604 = scalar_lea.hbm %s4, %s603
          %s606 = sshll.u32 %s574, 4
          %s607 = int_to_ptr.vmem [resolvable:$true] %s606
          %609 = dma.vmem_to_hbm [thread:$0]  %s607, 128, %s604, %s571
        $region60: #{tpu_custom_call.1} parent=31 // pred_fallthru
          _
      $region32: #{tpu_custom_call.1} parent=5 // pred_fallthru
        _
      %p610 = scmp.le.s32.totalorder 2, %s23
      // Predicated region
      $region61: #{tpu_custom_call.1} parent=5 // pred_check
        %p611 = pneg %p610
      $region62: #{tpu_custom_call.1} parent=5 // pred_check_branch
        %613 = sbr.rel (%p611) target = $region64
      $region63: #{tpu_custom_call.1} parent=5 // pred_region
        %s614 = ssub.s32 %s23, 2
        // Predicated region
        $region65: #{tpu_custom_call.1} parent=63 // pred_check
          %p615 = pneg %p139
        $region66: #{tpu_custom_call.1} parent=63 // pred_check_branch
          %617 = sbr.rel (%p615) target = $region68
        $region67: #{tpu_custom_call.1} parent=63 // pred_region
          %s618 = sand.u32 %s124, 1
          %s619 = scalar_lea.sflag [#allocation6], %s618
          %s620 = sand.u32 %s124, 1
          %s621 = smul.addr %s620, 16
          %s622 = scalar_lea.vmem [#allocation10], %s621
          %623 = dma.done %s619, 256
        $region68: #{tpu_custom_call.1} parent=63 // pred_fallthru
          _
        // Predicated region
        $region69: #{tpu_custom_call.1} parent=63 // pred_check
          %p624 = pneg %p165
        $region70: #{tpu_custom_call.1} parent=63 // pred_check_branch
          %626 = sbr.rel (%p624) target = $region72
        $region71: #{tpu_custom_call.1} parent=63 // pred_region
          %s627 = sand.u32 %s150, 1
          %s628 = scalar_lea.sflag [#allocation12], %s627
          %s629 = sand.u32 %s150, 1
          %s630 = smul.addr %s629, 8
          %s631 = scalar_lea.vmem [#allocation11], %s630
          %632 = dma.done %s628, 128
        $region72: #{tpu_custom_call.1} parent=63 // pred_fallthru
          _
      $region64: #{tpu_custom_call.1} parent=5 // pred_fallthru
        _
    $region6: #{tpu_custom_call.1} parent=1 // loop_footer
      %s27 = sadd.s32 1, %s23
    $region7: #{tpu_custom_call.1} parent=1 // loop_footer_branch
      %22 = sbr.rel target = $region3
    $region8: #{tpu_custom_call.1} parent=1 // loop_exit
      _
    %633 = vsyncpa [#allocation5], 1
    %s634 = scalar_lea.sflag [#allocation5], 1
    %635 = vsyncpa %s634, 1
    %636 = vsyncpa [#allocation8], 1
    %s637 = scalar_lea.sflag [#allocation8], 1
    %638 = vsyncpa %s637, 1
    %639 = vsyncpa [#allocation6], 1
    %s640 = scalar_lea.sflag [#allocation6], 1
    %641 = vsyncpa %s640, 1
    %642 = vsyncpa [#allocation12], 1
    %s643 = scalar_lea.sflag [#allocation12], 1
    %644 = vsyncpa %s643, 1

</llo_original>
